<compile_context>
chip_gen: v7x
topology: tpu7x:2x2x1
jax: 0.10.0
libtpu: 0.0.40
codegen_flags: <defaults>
</compile_context>

<pallas_src>
import jax
import jax.numpy as jnp
from jax.experimental import pallas as pl
from jax.experimental.pallas import tpu as pltpu

KH = 2
KW = 2


def _convt_kernel(x_ref, w_ref, b_ref, o_ref):
    """One (row-block, kh) grid step.

    x_ref: (tile_rows, W, Cin)        rows of the flattened (N*H, W, Cin) input
    w_ref: (KH, Cin, KW*Cout)         full weight, resident (single-buffered)
    b_ref: (1, KW*Cout)               bias tiled over kw
    o_ref: (tile_rows, 1, W, KW*Cout) output slab for this kh
    """
    kh = pl.program_id(1)
    t_rows, w_pix, c_in = x_ref.shape

    x2 = x_ref[...].reshape(t_rows * w_pix, c_in)          # free: lane dim (Cin) unchanged
    w_kh = w_ref[kh]                                        # (Cin, KW*Cout)
    y = jnp.dot(x2, w_kh, preferred_element_type=jnp.float32) + b_ref[...]
    o_ref[...] = y.reshape(o_ref.shape).astype(o_ref.dtype)


def upsample_convtranspose2x_nhwc(
    x_nhwc,
    weight,
    bias,
    *,
    tile_rows=None,
    target_matmul_rows=1024,          # sweep 512 / 1024 / 2048 per generation
    vmem_budget_bytes=40 * 1024 * 1024,
):
    """ConvTranspose2d(Cin, Cout, kernel_size=2, stride=2) on NHWC activations.

    x_nhwc : (N, H, W, Cin)
    weight : (Cin, Cout, 2, 2)   (PyTorch ConvTranspose2d layout)
    bias   : (Cout,)
    returns: (N, 2H, 2W, Cout)   NHWC
    """
    N, H, W, Cin = x_nhwc.shape
    Cin_w, Cout, kh_, kw_ = weight.shape
    assert Cin_w == Cin and kh_ == KH and kw_ == KW

    NH = N * H
    # Pure (metadata) reshape — no HBM pass.
    x_rows = x_nhwc.reshape(NH, W, Cin)
    # weight[ci, co, kh, kw] -> (kh, ci, kw, co) -> (KH, Cin, KW*Cout)
    w_mat = jnp.transpose(weight, (2, 0, 3, 1)).reshape(KH, Cin, KW * Cout)
    # bias broadcast over kw, matching the (kw, co) column order
    b_mat = jnp.tile(bias, KW).reshape(1, KW * Cout)

    # ---- tile sizing: biggest row tile that fits the VMEM budget -----------
    elt = jnp.dtype(x_nhwc.dtype).itemsize
    resident_bytes = w_mat.size * elt + b_mat.size * elt        # single-buffered
    per_nh_row = W * (Cin + KW * Cout) * elt                    # x row + one-kh out row
    cap = max(1, (vmem_budget_bytes - resident_bytes) // (2 * per_nh_row))
    if tile_rows is None:
        tile_rows = max(1, target_matmul_rows // max(W, 1))
    tile_rows = int(max(1, min(tile_rows, cap, NH)))
    grid_rows = int(pl.cdiv(NH, tile_rows))                     # ragged tail OK

    out = pl.pallas_call(
        _convt_kernel,
        out_shape=jax.ShapeDtypeStruct((NH, KH, W, KW * Cout), x_nhwc.dtype),
        grid_spec=pltpu.PrefetchScalarGridSpec(
            num_scalar_prefetch=0,
            grid=(grid_rows, KH),
            in_specs=[
                pl.BlockSpec((tile_rows, W, Cin), lambda i, kh: (i, 0, 0)),
                pl.BlockSpec((KH, Cin, KW * Cout), lambda i, kh: (0, 0, 0),
                             pipeline_mode=pl.Buffered(1)),
                pl.BlockSpec((1, KW * Cout), lambda i, kh: (0, 0),
                             pipeline_mode=pl.Buffered(1)),
            ],
            out_specs=pl.BlockSpec((tile_rows, 1, W, KW * Cout),
                                   lambda i, kh: (i, kh, 0, 0)),
        ),
        compiler_params=pltpu.CompilerParams(
            dimension_semantics=("parallel", "arbitrary"),
            vmem_limit_bytes=48 * 1024 * 1024,
        ),
    )(x_rows, w_mat, b_mat)

    # (NH, KH, W, KW*Cout) is bit-identical to NHWC (N, 2H, 2W, Cout): pure reshape.
    return out.reshape(N, KH * H, KW * W, Cout)


def upsample_block_convtranspose(x_nchw, weight, bias, **kwargs):
    """PyTorch-interface (NCHW) wrapper around the NHWC kernel.

    The two transposes below are pure interface glue for NCHW parity; an
    NHWC-native model should call `upsample_convtranspose2x_nhwc` directly.
    """
    x_nhwc = jnp.transpose(x_nchw, (0, 2, 3, 1))
    y_nhwc = upsample_convtranspose2x_nhwc(x_nhwc, weight, bias, **kwargs)
    return jnp.transpose(y_nhwc, (0, 3, 1, 2))


def _reference_convtranspose(x, weight, bias):
    # y[n, co, 2h+kh, 2w+kw] = sum_ci x[n,ci,h,w] * W[ci,co,kh,kw] + b[co]
    y = jnp.einsum("nchw,cokl->nohwkl", x, weight)
    N, Cout, H, W, kh_, kw_ = y.shape
    y = jnp.transpose(y, (0, 1, 2, 4, 3, 5)).reshape(N, Cout, 2 * H, 2 * W)
    return y + bias[None, :, None, None]


if __name__ == "__main__":
    key = jax.random.PRNGKey(0)
    kx, kw_key, kb_key = jax.random.split(key, 3)

    # assert in the PyTorch forward requires out_channels == in_channels
    N, C, H, W = 2, 4, 16, 16
    x = jax.random.normal(kx, (N, C, H, W), dtype=jnp.float32)
    weight = 0.1 * jax.random.normal(kw_key, (C, C, 2, 2), dtype=jnp.float32)
    bias = 0.1 * jax.random.normal(kb_key, (C,), dtype=jnp.float32)

    ref = _reference_convtranspose(x, weight, bias)

    # default (auto) tile size
    out = jax.block_until_ready(upsample_block_convtranspose(x, weight, bias))
    assert out.shape == (N, C, 2 * H, 2 * W), out.shape
    assert jnp.allclose(out, ref, atol=1e-5, rtol=1e-5), float(
        jnp.max(jnp.abs(out - ref))
    )

    # ragged-tail path: N*H = 32 rows with tile_rows=12 -> blocks of 12, 12, 8
    out2 = jax.block_until_ready(
        upsample_block_convtranspose(x, weight, bias, tile_rows=12)
    )
    assert jnp.allclose(out2, ref, atol=1e-5, rtol=1e-5), float(
        jnp.max(jnp.abs(out2 - ref))
    )

    print("KERNEL_OK")
</pallas_src>

<mosaic_0001>
module attributes {stable_mosaic.version = 11 : i64} {
  func.func @_convt_kernel(%arg0: i32, %arg1: i32, %arg2: memref<32x16x4xf32, #tpu.memory_space<vmem>>, %arg3: memref<2x4x8xf32, #tpu.memory_space<vmem>>, %arg4: memref<1x8xf32, #tpu.memory_space<vmem>>, %arg5: memref<32x1x16x8xf32, #tpu.memory_space<vmem>>) attributes {dimension_semantics = [#tpu.dimension_semantics<parallel>, #tpu.dimension_semantics<arbitrary>], iteration_bounds = array<i64: 1, 2>, scalar_prefetch = 0 : i64, scratch_operands = 0 : i64, tpu.core_type = #tpu.core_type<tc>, window_params = [{transform_indices = @transform_0, window_bounds = array<i64: 32, 16, 4>}, {pipeline_mode = #tpu.pipeline_mode<synchronous>, transform_indices = @transform_1, window_bounds = array<i64: 2, 4, 8>}, {pipeline_mode = #tpu.pipeline_mode<synchronous>, transform_indices = @transform_2, window_bounds = array<i64: 1, 8>}, {transform_indices = @transform_3, window_bounds = array<i64: 32, 1, 16, 8>}]} {
    %c0 = arith.constant 0 : index
    %c0_0 = arith.constant 0 : index
    %c0_1 = arith.constant 0 : index
    %0 = vector.load %arg2[%c0, %c0_0, %c0_1] : memref<32x16x4xf32, #tpu.memory_space<vmem>>, vector<32x16x4xf32>
    %1 = vector.shape_cast %0 : vector<32x16x4xf32> to vector<512x4xf32>
    %2 = arith.index_cast %arg1 : i32 to index
    %c0_2 = arith.constant 0 : index
    %c0_3 = arith.constant 0 : index
    %3 = vector.load %arg3[%2, %c0_2, %c0_3] : memref<2x4x8xf32, #tpu.memory_space<vmem>>, vector<1x4x8xf32>
    %4 = vector.shape_cast %3 : vector<1x4x8xf32> to vector<4x8xf32>
    %cst = arith.constant dense<0.000000e+00> : vector<512x8xf32>
    %5 = tpu.matmul %1, %4, %cst {dimension_numbers = #tpu.dot_dimension_numbers<[1], [0], [0], [1], [0, 0, 1, 1], [], []>} : vector<512x4xf32>, vector<4x8xf32>, vector<512x8xf32> -> vector<512x8xf32>
    %c0_4 = arith.constant 0 : index
    %c0_5 = arith.constant 0 : index
    %6 = vector.load %arg4[%c0_4, %c0_5] : memref<1x8xf32, #tpu.memory_space<vmem>>, vector<1x8xf32>
    %7 = vector.broadcast %6 : vector<1x8xf32> to vector<512x8xf32>
    %8 = arith.addf %5, %7 : vector<512x8xf32>
    %9 = vector.shape_cast %8 : vector<512x8xf32> to vector<32x1x16x8xf32>
    %c0_6 = arith.constant 0 : index
    %c0_7 = arith.constant 0 : index
    %c0_8 = arith.constant 0 : index
    %c0_9 = arith.constant 0 : index
    %10 = vector.load %arg5[%c0_6, %c0_7, %c0_8, %c0_9] : memref<32x1x16x8xf32, #tpu.memory_space<vmem>>, vector<32x1x16x8xf32>
    tpu.vector_store %arg5[%c0_6, %c0_7, %c0_8, %c0_9], %9 {strides = array<i32>} : memref<32x1x16x8xf32, #tpu.memory_space<vmem>>, vector<32x1x16x8xf32>,
    return
  }
  func.func @transform_0(%arg0: i32, %arg1: i32) -> (i32, i32, i32) {
    %c0_i32 = arith.constant 0 : i32
    %c0_i32_0 = arith.constant 0 : i32
    %c0_i32_1 = arith.constant 0 : i32
    return %arg0, %c0_i32, %c0_i32_0 : i32, i32, i32
  }
  func.func @transform_1(%arg0: i32, %arg1: i32) -> (i32, i32, i32) {
    %c0_i32 = arith.constant 0 : i32
    %c0_i32_0 = arith.constant 0 : i32
    %c0_i32_1 = arith.constant 0 : i32
    %c0_i32_2 = arith.constant 0 : i32
    return %c0_i32, %c0_i32_0, %c0_i32_1 : i32, i32, i32
  }
  func.func @transform_2(%arg0: i32, %arg1: i32) -> (i32, i32) {
    %c0_i32 = arith.constant 0 : i32
    %c0_i32_0 = arith.constant 0 : i32
    %c0_i32_1 = arith.constant 0 : i32
    return %c0_i32, %c0_i32_0 : i32, i32
  }
  func.func @transform_3(%arg0: i32, %arg1: i32) -> (i32, i32, i32, i32) {
    %c0_i32 = arith.constant 0 : i32
    %c0_i32_0 = arith.constant 0 : i32
    %c0_i32_1 = arith.constant 0 : i32
    return %arg0, %arg1, %c0_i32, %c0_i32_0 : i32, i32, i32, i32
  }
}

</mosaic_0001>

<llo_original>
// kernel: tpu_custom_call.1
$region0: #{tpu_custom_call.1}
  #allocation0 [shape = 'u32[]', space=smem, size = 0x4, offset = 0x4, fixed_abs, tag = 'smem constant byte address 0x4 - core index']
  #allocation1 [shape = 'u32[144,128]{1,0:T(1,128)}', space=vmem, size = 0x12000, scoped, tag = 'internal scratch']
  %s0 = inlined_call_operand.vmem [shape: f32[32,16,4], index: 0, kind: input, shape index: {}]
  %s1 = inlined_call_operand.vmem [shape: f32[2,4,8], index: 1, kind: input, shape index: {}]
  %s2 = inlined_call_operand.vmem [shape: f32[1,8], index: 2, kind: input, shape index: {}]
  %s3 = inlined_call_operand.vmem [shape: f32[32,2,16,8], index: 3, kind: output, shape index: {}]
  %s4 = sld [smem:[#allocation0]]
  $region79: #{tpu_custom_call.1} parent=0
    _
  %s6 = ssub.s32 1, %s4
  %s7 = scalar_select 0, %s6, %s4
  $region1: #{tpu_custom_call.1} parent=0
    #allocation2 [shape = 'u8[524288]{0}', space=vmem, size = 0x80000, scoped, tag = 'output window, operand 0']
    loop: start=0, step=1, limit=4
    $region2: #{tpu_custom_call.1} parent=1 // loop_pre_header
      _
    $region3: #{tpu_custom_call.1} parent=1 // loop_header
      %s9 = sphi 0, %s13
      %p10 = scmp.ge.s32.totalorder %s9, 4
      %s16 = sphi 0, %s28
      %s17 = sphi 0, %s24
      %s18 = sphi 0, %s16
      %s19 = sphi 0, %s17
      %s20 = sphi 0, %s18
      %s21 = sphi 0, %s19
      %s31 = sphi 0, %s33
      %s34 = sphi 0, %s31
      %s35 = sphi 0, %s34
      %s51 = sphi 0, %s35
      %s55 = sphi 0, %s55
      %s57 = sphi 0, %s55
      %s58 = sphi 0, %s57
      %s72 = sphi 0, %s58
      %s76 = sphi 0, %s76
      %s78 = sphi 0, %s76
      %s79 = sphi 0, %s78
      %s93 = sphi 0, %s79
      %s101 = sphi 0, %s103
      %s104 = sphi 0, %s101
      %s105 = sphi 0, %s104
      %s121 = sphi 0, %s105
    $region4: #{tpu_custom_call.1} parent=1 // loop_header_branch
      %12 = sbr.rel (%p10) target = $region8
    $region5: #{tpu_custom_call.1} parent=1 // loop_body
      %s14 = ssub.s32 %s9, 1
      %s15 = ssub.s32 %s9, 2
      %s22 = sadd.s32 1, %s17
      %p23 = scmp.ge.s32.totalorder %s22, 2
      %s24 = scalar_select %p23, 0, %s22
      %s25 = sadd.s32 1, %s16
      %s26 = scalar_select %p23, %s25, %s16
      %p27 = scmp.ge.s32.totalorder %s26, 1
      %s28 = scalar_select %p27, 0, %s26
      %s29 = ssub.s32 %s16, %s28
      %p30 = scmp.eq.s32.totalorder %s29, 0
      %s32 = sadd.s32 %s31, 1
      %s33 = scalar_select %p30, %s31, %s32
      %p36 = pneg %p30
      %p37 = scmp.eq.s32.totalorder %s9, 1
      %p38 = por %p36, %p37
      %p39 = scmp.ne.s32.totalorder %s31, %s34
      %p40 = scmp.eq.s32.totalorder %s9, 0
      %p41 = por %p39, %p40
      %p42 = scmp.ne.s32.totalorder %s31, %s34
      %p43 = scmp.eq.s32.totalorder %s14, 1
      %p44 = por %p42, %p43
      %p45 = scmp.ne.s32.totalorder %s34, %s35
      %p46 = scmp.eq.s32.totalorder %s14, 0
      %p47 = por %p45, %p46
      %p48 = scmp.ne.s32.totalorder %s34, %s35
      %p49 = scmp.eq.s32.totalorder %s15, 1
      %p50 = por %p48, %p49
      %p52 = scmp.ne.s32.totalorder %s35, %s51
      %p53 = scmp.eq.s32.totalorder %s15, 0
      %p54 = por %p52, %p53
      %s56 = sadd.s32 %s55, 1
      %p59 = scmp.eq.s32.totalorder %s9, 1
      %p60 = scmp.ne.s32.totalorder %s55, %s57
      %p61 = scmp.eq.s32.totalorder %s9, 0
      %p62 = por %p60, %p61
      %p63 = scmp.ne.s32.totalorder %s55, %s57
      %p64 = scmp.eq.s32.totalorder %s14, 1
      %p65 = por %p63, %p64
      %p66 = scmp.ne.s32.totalorder %s57, %s58
      %p67 = scmp.eq.s32.totalorder %s14, 0
      %p68 = por %p66, %p67
      %p69 = scmp.ne.s32.totalorder %s57, %s58
      %p70 = scmp.eq.s32.totalorder %s15, 1
      %p71 = por %p69, %p70
      %p73 = scmp.ne.s32.totalorder %s58, %s72
      %p74 = scmp.eq.s32.totalorder %s15, 0
      %p75 = por %p73, %p74
      %s77 = sadd.s32 %s76, 1
      %p80 = scmp.eq.s32.totalorder %s9, 1
      %p81 = scmp.ne.s32.totalorder %s76, %s78
      %p82 = scmp.eq.s32.totalorder %s9, 0
      %p83 = por %p81, %p82
      %p84 = scmp.ne.s32.totalorder %s76, %s78
      %p85 = scmp.eq.s32.totalorder %s14, 1
      %p86 = por %p84, %p85
      %p87 = scmp.ne.s32.totalorder %s78, %s79
      %p88 = scmp.eq.s32.totalorder %s14, 0
      %p89 = por %p87, %p88
      %p90 = scmp.ne.s32.totalorder %s78, %s79
      %p91 = scmp.eq.s32.totalorder %s15, 1
      %p92 = por %p90, %p91
      %p94 = scmp.ne.s32.totalorder %s79, %s93
      %p95 = scmp.eq.s32.totalorder %s15, 0
      %p96 = por %p94, %p95
      %s97 = ssub.s32 %s16, %s28
      %s98 = ssub.s32 %s17, %s24
      %s99 = sor.u32 %s97, %s98
      %p100 = scmp.eq.s32.totalorder %s99, 0
      %s102 = sadd.s32 %s101, 1
      %s103 = scalar_select %p100, %s101, %s102
      %p106 = pneg %p100
      %p107 = scmp.eq.s32.totalorder %s9, 1
      %p108 = por %p106, %p107
      %p109 = scmp.ne.s32.totalorder %s101, %s104
      %p110 = scmp.eq.s32.totalorder %s9, 0
      %p111 = por %p109, %p110
      %p112 = scmp.ne.s32.totalorder %s101, %s104
      %p113 = scmp.eq.s32.totalorder %s14, 1
      %p114 = por %p112, %p113
      %p115 = scmp.ne.s32.totalorder %s104, %s105
      %p116 = scmp.eq.s32.totalorder %s14, 0
      %p117 = por %p115, %p116
      %p118 = scmp.ne.s32.totalorder %s104, %s105
      %p119 = scmp.eq.s32.totalorder %s15, 1
      %p120 = por %p118, %p119
      %p122 = scmp.ne.s32.totalorder %s105, %s121
      %p123 = scmp.eq.s32.totalorder %s15, 0
      %p124 = por %p122, %p123
      %p125 = scmp.le.s32.totalorder 1, %s9
      %p126 = scmp.lt.s32.totalorder %s9, 3
      %p127 = pnand %p125, %p126
      %p128 = pneg %p127
      // Predicated region
      $region9: #{tpu_custom_call.1} parent=5 // pred_check
        _
      $region10: #{tpu_custom_call.1} parent=5 // pred_check_branch
        %130 = sbr.rel (%p127) target = $region12
      $region11: #{tpu_custom_call.1} parent=5 // pred_region
        %s131 = ssub.s32 %s9, 1
        // Predicated region
        $region13: #{tpu_custom_call.1} parent=11 // pred_check
          %p132 = pneg %p47
        $region14: #{tpu_custom_call.1} parent=11 // pred_check_branch
          %134 = sbr.rel (%p132) target = $region16
        $region15: #{tpu_custom_call.1} parent=11 // pred_region
          %s135 = smul.u32 32, %s18
          %p136 = scmp.lt.s32.totalorder %s135, 31
          %s137 = scalar_select %p136, %s135, 31
          %s138 = smul.addr %s137, 2
          %s139 = smul.addr %s138, 8
          %s140 = scalar_lea.vmem %s0, %s139
          %s141 = smul.u32 32, %s18
        $region16: #{tpu_custom_call.1} parent=11 // pred_fallthru
          _
        // Predicated region
        $region17: #{tpu_custom_call.1} parent=11 // pred_check
          %p142 = pneg %p68
        $region18: #{tpu_custom_call.1} parent=11 // pred_check_branch
          %144 = sbr.rel (%p142) target = $region20
        $region19: #{tpu_custom_call.1} parent=11 // pred_region
          _
        $region20: #{tpu_custom_call.1} parent=11 // pred_fallthru
          _
        // Predicated region
        $region21: #{tpu_custom_call.1} parent=11 // pred_check
          %p145 = pneg %p89
        $region22: #{tpu_custom_call.1} parent=11 // pred_check_branch
          %147 = sbr.rel (%p145) target = $region24
        $region23: #{tpu_custom_call.1} parent=11 // pred_region
          _
        $region24: #{tpu_custom_call.1} parent=11 // pred_fallthru
          _
      $region12: #{tpu_custom_call.1} parent=5 // pred_fallthru
        _
      %p148 = scmp.lt.s32.totalorder %s9, 2
      // Predicated region
      $region25: #{tpu_custom_call.1} parent=5 // pred_check
        %p149 = pneg %p148
      $region26: #{tpu_custom_call.1} parent=5 // pred_check_branch
        %151 = sbr.rel (%p149) target = $region28
      $region27: #{tpu_custom_call.1} parent=5 // pred_region
        _
      $region28: #{tpu_custom_call.1} parent=5 // pred_fallthru
        _
      %p152 = scmp.le.s32.totalorder 1, %s9
      %p153 = scmp.lt.s32.totalorder %s9, 3
      %p154 = pnand %p152, %p153
      %p155 = pneg %p154
      // Predicated region
      $region29: #{tpu_custom_call.1} parent=5 // pred_check
        _
      $region30: #{tpu_custom_call.1} parent=5 // pred_check_branch
        %157 = sbr.rel (%p154) target = $region32
      $region31: #{tpu_custom_call.1} parent=5 // pred_region
        %s158 = ssub.s32 %s9, 1
        %s159 = smul.u32 32, %s18
        %p160 = scmp.lt.s32.totalorder %s159, 31
        %s161 = scalar_select %p160, %s159, 31
        %s162 = smul.addr %s161, 2
        %s163 = smul.addr %s162, 8
        %s164 = scalar_lea.vmem %s0, %s163
        %p165 = pneg %p47
        %p166 = pneg %p44
        %p167 = pneg %p68
        %p168 = pneg %p65
        %p169 = pneg %p89
        %p170 = pneg %p86
        %p171 = pneg %p117
        %p172 = pneg %p114
        %s173 = sand.u32 %s104, 1
        %s174 = sand.u32 %s104, 1
        %s175 = smul.addr %s174, 512
        %s176 = scalar_lea.vmem [#allocation2], %s175
        %s177 = smul.u32 32, %s18
        %p178 = scmp.lt.s32.totalorder %s177, 31
        %s179 = scalar_select %p178, %s177, 31
        %s180 = smul.addr %s179, 2
        %s181 = smul.addr %s180, 8
        %s182 = scalar_lea.vmem %s0, %s181
        %s183 = smul.u32 32, %s18
        %s184 = smul.u32 32, %s18
        %v185 = vld [vmem:[%s182] sm:$0xff]
        %v186 = vld [vmem:[%s182 + $0x8] sm:$0xff]
        %v187 = vld [vmem:[%s182 + $0x10] sm:$0xff]
        %v188 = vld [vmem:[%s182 + $0x18] sm:$0xff]
        %v189 = vld [vmem:[%s182 + $0x20] sm:$0xff]
        %v190 = vld [vmem:[%s182 + $0x28] sm:$0xff]
        %v191 = vld [vmem:[%s182 + $0x30] sm:$0xff]
        %v192 = vld [vmem:[%s182 + $0x38] sm:$0xff]
        %v193 = vld [vmem:[%s182 + $0x40] sm:$0xff]
        %v194 = vld [vmem:[%s182 + $0x48] sm:$0xff]
        %v195 = vld [vmem:[%s182 + $0x50] sm:$0xff]
        %v196 = vld [vmem:[%s182 + $0x58] sm:$0xff]
        %v197 = vld [vmem:[%s182 + $0x60] sm:$0xff]
        %v198 = vld [vmem:[%s182 + $0x68] sm:$0xff]
        %v199 = vld [vmem:[%s182 + $0x70] sm:$0xff]
        %v200 = vld [vmem:[%s182 + $0x78] sm:$0xff]
        %v201 = vld [vmem:[%s182 + $0x80] sm:$0xff]
        %v202 = vld [vmem:[%s182 + $0x88] sm:$0xff]
        %v203 = vld [vmem:[%s182 + $0x90] sm:$0xff]
        %v204 = vld [vmem:[%s182 + $0x98] sm:$0xff]
        %v205 = vld [vmem:[%s182 + $0xa0] sm:$0xff]
        %v206 = vld [vmem:[%s182 + $0xa8] sm:$0xff]
        %v207 = vld [vmem:[%s182 + $0xb0] sm:$0xff]
        %v208 = vld [vmem:[%s182 + $0xb8] sm:$0xff]
        %v209 = vld [vmem:[%s182 + $0xc0] sm:$0xff]
        %v210 = vld [vmem:[%s182 + $0xc8] sm:$0xff]
        %v211 = vld [vmem:[%s182 + $0xd0] sm:$0xff]
        %v212 = vld [vmem:[%s182 + $0xd8] sm:$0xff]
        %v213 = vld [vmem:[%s182 + $0xe0] sm:$0xff]
        %v214 = vld [vmem:[%s182 + $0xe8] sm:$0xff]
        %v215 = vld [vmem:[%s182 + $0xf0] sm:$0xff]
        %v216 = vld [vmem:[%s182 + $0xf8] sm:$0xff]
        %v217 = vld [vmem:[%s182 + $0x100] sm:$0xff]
        %v218 = vld [vmem:[%s182 + $0x108] sm:$0xff]
        %v219 = vld [vmem:[%s182 + $0x110] sm:$0xff]
        %v220 = vld [vmem:[%s182 + $0x118] sm:$0xff]
        %v221 = vld [vmem:[%s182 + $0x120] sm:$0xff]
        %v222 = vld [vmem:[%s182 + $0x128] sm:$0xff]
        %v223 = vld [vmem:[%s182 + $0x130] sm:$0xff]
        %v224 = vld [vmem:[%s182 + $0x138] sm:$0xff]
        %v225 = vld [vmem:[%s182 + $0x140] sm:$0xff]
        %v226 = vld [vmem:[%s182 + $0x148] sm:$0xff]
        %v227 = vld [vmem:[%s182 + $0x150] sm:$0xff]
        %v228 = vld [vmem:[%s182 + $0x158] sm:$0xff]
        %v229 = vld [vmem:[%s182 + $0x160] sm:$0xff]
        %v230 = vld [vmem:[%s182 + $0x168] sm:$0xff]
        %v231 = vld [vmem:[%s182 + $0x170] sm:$0xff]
        %v232 = vld [vmem:[%s182 + $0x178] sm:$0xff]
        %v233 = vld [vmem:[%s182 + $0x180] sm:$0xff]
        %v234 = vld [vmem:[%s182 + $0x188] sm:$0xff]
        %v235 = vld [vmem:[%s182 + $0x190] sm:$0xff]
        %v236 = vld [vmem:[%s182 + $0x198] sm:$0xff]
        %v237 = vld [vmem:[%s182 + $0x1a0] sm:$0xff]
        %v238 = vld [vmem:[%s182 + $0x1a8] sm:$0xff]
        %v239 = vld [vmem:[%s182 + $0x1b0] sm:$0xff]
        %v240 = vld [vmem:[%s182 + $0x1b8] sm:$0xff]
        %v241 = vld [vmem:[%s182 + $0x1c0] sm:$0xff]
        %v242 = vld [vmem:[%s182 + $0x1c8] sm:$0xff]
        %v243 = vld [vmem:[%s182 + $0x1d0] sm:$0xff]
        %v244 = vld [vmem:[%s182 + $0x1d8] sm:$0xff]
        %v245 = vld [vmem:[%s182 + $0x1e0] sm:$0xff]
        %v246 = vld [vmem:[%s182 + $0x1e8] sm:$0xff]
        %v247 = vld [vmem:[%s182 + $0x1f0] sm:$0xff]
        %v248 = vld [vmem:[%s182 + $0x1f8] sm:$0xff]
        %s249 = smul.u32 %s19, 4
        %s250 = scalar_lea.vmem %s1, %s249
        %v251 = vld [vmem:[%s250] sm:$0xf]
        %v252 = vld [vmem:[%s2] sm:$0x1]
        %v254 = vlaneseq
        %v255 = vshrl.u32 %v254, 7
        %v256 = vsub.s32 0, %v255
        %v257 = vrot.slane %v252, %v256
        %vm259 = vcmask 31744
        %v261 = vsel %vm259, %v185, 0
        %v264 = vsel %vm259, %v186, 0
        %v267 = vsel %vm259, %v187, 0
        %v270 = vsel %vm259, %v188, 0
        %v273 = vsel %vm259, %v189, 0
        %v276 = vsel %vm259, %v190, 0
        %v279 = vsel %vm259, %v191, 0
        %v282 = vsel %vm259, %v192, 0
        %v285 = vsel %vm259, %v193, 0
        %v288 = vsel %vm259, %v194, 0
        %v291 = vsel %vm259, %v195, 0
        %v294 = vsel %vm259, %v196, 0
        %v297 = vsel %vm259, %v197, 0
        %v300 = vsel %vm259, %v198, 0
        %v303 = vsel %vm259, %v199, 0
        %v306 = vsel %vm259, %v200, 0
        %v309 = vsel %vm259, %v201, 0
        %v312 = vsel %vm259, %v202, 0
        %v315 = vsel %vm259, %v203, 0
        %v318 = vsel %vm259, %v204, 0
        %v321 = vsel %vm259, %v205, 0
        %v324 = vsel %vm259, %v206, 0
        %v327 = vsel %vm259, %v207, 0
        %v330 = vsel %vm259, %v208, 0
        %v333 = vsel %vm259, %v209, 0
        %v336 = vsel %vm259, %v210, 0
        %v339 = vsel %vm259, %v211, 0
        %v342 = vsel %vm259, %v212, 0
        %v345 = vsel %vm259, %v213, 0
        %v348 = vsel %vm259, %v214, 0
        %v351 = vsel %vm259, %v215, 0
        %v354 = vsel %vm259, %v216, 0
        %v357 = vsel %vm259, %v217, 0
        %v360 = vsel %vm259, %v218, 0
        %v363 = vsel %vm259, %v219, 0
        %v366 = vsel %vm259, %v220, 0
        %v369 = vsel %vm259, %v221, 0
        %v372 = vsel %vm259, %v222, 0
        %v375 = vsel %vm259, %v223, 0
        %v378 = vsel %vm259, %v224, 0
        %v381 = vsel %vm259, %v225, 0
        %v384 = vsel %vm259, %v226, 0
        %v387 = vsel %vm259, %v227, 0
        %v390 = vsel %vm259, %v228, 0
        %v393 = vsel %vm259, %v229, 0
        %v396 = vsel %vm259, %v230, 0
        %v399 = vsel %vm259, %v231, 0
        %v402 = vsel %vm259, %v232, 0
        %v405 = vsel %vm259, %v233, 0
        %v408 = vsel %vm259, %v234, 0
        %v411 = vsel %vm259, %v235, 0
        %v414 = vsel %vm259, %v236, 0
        %v417 = vsel %vm259, %v237, 0
        %v420 = vsel %vm259, %v238, 0
        %v423 = vsel %vm259, %v239, 0
        %v426 = vsel %vm259, %v240, 0
        %v429 = vsel %vm259, %v241, 0
        %v432 = vsel %vm259, %v242, 0
        %v435 = vsel %vm259, %v243, 0
        %v438 = vsel %vm259, %v244, 0
        %v441 = vsel %vm259, %v245, 0
        %v444 = vsel %vm259, %v246, 0
        %v447 = vsel %vm259, %v247, 0
        %v450 = vsel %vm259, %v248, 0
        %vm452 = vcmask 1043456
        %v454 = vsel %vm452, %v251, 0
        %456 = vmatprep.subr.mxu0 0.0
        %457 = vmatpush1.msra.mxu0 %v454
        %458 = vmatprep.subr.mxu0 0.0
        %459 = vmatpush1.msra.mxu0 0.0
        %460 = vmatprep.subr.mxu0 0.0
        %461 = vmatpush1.msra.mxu0 0.0
        %462 = vmatprep.subr.mxu0 0.0
        %463 = vmatpush1.msra.mxu0 0.0
        %464 = vmatprep.subr.mxu0 0.0
        %465 = vmatpush1.msra.mxu0 0.0
        %466 = vmatprep.subr.mxu0 0.0
        %467 = vmatpush1.msra.mxu0 0.0
        %468 = vmatprep.subr.mxu0 0.0
        %469 = vmatpush1.msra.mxu0 0.0
        %470 = vmatprep.subr.mxu0 0.0
        %471 = vmatpush1.msra.mxu0 0.0
        %472 = vmatprep.subr.mxu0 0.0
        %473 = vmatpush1.msra.mxu0 0.0
        %474 = vmatprep.subr.mxu0 0.0
        %475 = vmatpush1.msra.mxu0 0.0
        %476 = vmatprep.subr.mxu0 0.0
        %477 = vmatpush1.msra.mxu0 0.0
        %478 = vmatprep.subr.mxu0 0.0
        %479 = vmatpush1.msra.mxu0 0.0
        %480 = vmatprep.subr.mxu0 0.0
        %481 = vmatpush1.msra.mxu0 0.0
        %482 = vmatprep.subr.mxu0 0.0
        %483 = vmatpush1.msra.mxu0 0.0
        %484 = vmatprep.subr.mxu0 0.0
        %485 = vmatpush1.msra.mxu0 0.0
        %486 = vmatprep.subr.mxu0 0.0
        %487 = vmatpush1.msra.mxu0 0.0
        %488 = vmatprep.subr.mxu0 0.0
        %489 = vmatpush1.msra.mxu0 0.0
        %490 = vmatprep.subr.mxu0 0.0
        %491 = vmatpush1.msra.mxu0 0.0
        %492 = vmatprep.subr.mxu0 0.0
        %493 = vmatpush1.msra.mxu0 0.0
        %494 = vmatprep.subr.mxu0 0.0
        %495 = vmatpush1.msra.mxu0 0.0
        %496 = vmatprep.subr.mxu0 0.0
        %497 = vmatpush1.msra.mxu0 0.0
        %498 = vmatprep.subr.mxu0 0.0
        %499 = vmatpush1.msra.mxu0 0.0
        %500 = vmatprep.subr.mxu0 0.0
        %501 = vmatpush1.msra.mxu0 0.0
        %502 = vmatprep.subr.mxu0 0.0
        %503 = vmatpush1.msra.mxu0 0.0
        %504 = vmatprep.subr.mxu0 0.0
        %505 = vmatpush1.msra.mxu0 0.0
        %506 = vmatprep.subr.mxu0 0.0
        %507 = vmatpush1.msra.mxu0 0.0
        %508 = vmatprep.subr.mxu0 0.0
        %509 = vmatpush1.msra.mxu0 0.0
        %510 = vmatprep.subr.mxu0 0.0
        %511 = vmatpush1.msra.mxu0 0.0
        %512 = vmatprep.subr.mxu0 0.0
        %513 = vmatpush1.msra.mxu0 0.0
        %514 = vmatprep.subr.mxu0 0.0
        %515 = vmatpush1.msra.mxu0 0.0
        %516 = vmatprep.subr.mxu0 0.0
        %517 = vmatpush1.msra.mxu0 0.0
        %518 = vmatprep.subr.mxu0 0.0
        %519 = vmatpush1.msra.mxu0 0.0
        %520 = vmatprep.mubr.f32.mxu0 0.0
        %521 = vmatmul.mubr.f32.gmra.mrb[0].mxu0 %v261
        %v522 = vpop.f32.mrb[0].mxu0
        %v523 = vadd.f32 %v257, %v522
        %v524 = vpop.f32.mrb[0].mxu0
        %525 = vmatprep.mubr.f32.mxu0 0.0
        %526 = vmatmul.mubr.f32.gmra.mrb[0].mxu0 %v264
        %v527 = vpop.f32.mrb[0].mxu0
        %v528 = vadd.f32 %v257, %v527
        %v529 = vpop.f32.mrb[0].mxu0
        %530 = vmatprep.mubr.f32.mxu0 0.0
        %531 = vmatmul.mubr.f32.gmra.mrb[0].mxu0 %v267
        %v532 = vpop.f32.mrb[0].mxu0
        %v533 = vadd.f32 %v257, %v532
        %v534 = vpop.f32.mrb[0].mxu0
        %535 = vmatprep.mubr.f32.mxu0 0.0
        %536 = vmatmul.mubr.f32.gmra.mrb[0].mxu0 %v270
        %v537 = vpop.f32.mrb[0].mxu0
        %v538 = vadd.f32 %v257, %v537
        %v539 = vpop.f32.mrb[0].mxu0
        %540 = vmatprep.mubr.f32.mxu0 0.0
        %541 = vmatmul.mubr.f32.gmra.mrb[0].mxu0 %v273
        %v542 = vpop.f32.mrb[0].mxu0
        %v543 = vadd.f32 %v257, %v542
        %v544 = vpop.f32.mrb[0].mxu0
        %545 = vmatprep.mubr.f32.mxu0 0.0
        %546 = vmatmul.mubr.f32.gmra.mrb[0].mxu0 %v276
        %v547 = vpop.f32.mrb[0].mxu0
        %v548 = vadd.f32 %v257, %v547
        %v549 = vpop.f32.mrb[0].mxu0
        %550 = vmatprep.mubr.f32.mxu0 0.0
        %551 = vmatmul.mubr.f32.gmra.mrb[0].mxu0 %v279
        %v552 = vpop.f32.mrb[0].mxu0
        %v553 = vadd.f32 %v257, %v552
        %v554 = vpop.f32.mrb[0].mxu0
        %555 = vmatprep.mubr.f32.mxu0 0.0
        %556 = vmatmul.mubr.f32.gmra.mrb[0].mxu0 %v282
        %v557 = vpop.f32.mrb[0].mxu0
        %v558 = vadd.f32 %v257, %v557
        %v559 = vpop.f32.mrb[0].mxu0
        %560 = vmatprep.mubr.f32.mxu0 0.0
        %561 = vmatmul.mubr.f32.gmra.mrb[0].mxu0 %v285
        %v562 = vpop.f32.mrb[0].mxu0
        %v563 = vadd.f32 %v257, %v562
        %v564 = vpop.f32.mrb[0].mxu0
        %565 = vmatprep.mubr.f32.mxu0 0.0
        %566 = vmatmul.mubr.f32.gmra.mrb[0].mxu0 %v288
        %v567 = vpop.f32.mrb[0].mxu0
        %v568 = vadd.f32 %v257, %v567
        %v569 = vpop.f32.mrb[0].mxu0
        %570 = vmatprep.mubr.f32.mxu0 0.0
        %571 = vmatmul.mubr.f32.gmra.mrb[0].mxu0 %v291
        %v572 = vpop.f32.mrb[0].mxu0
        %v573 = vadd.f32 %v257, %v572
        %v574 = vpop.f32.mrb[0].mxu0
        %575 = vmatprep.mubr.f32.mxu0 0.0
        %576 = vmatmul.mubr.f32.gmra.mrb[0].mxu0 %v294
        %v577 = vpop.f32.mrb[0].mxu0
        %v578 = vadd.f32 %v257, %v577
        %v579 = vpop.f32.mrb[0].mxu0
        %580 = vmatprep.mubr.f32.mxu0 0.0
        %581 = vmatmul.mubr.f32.gmra.mrb[0].mxu0 %v297
        %v582 = vpop.f32.mrb[0].mxu0
        %v583 = vadd.f32 %v257, %v582
        %v584 = vpop.f32.mrb[0].mxu0
        %585 = vmatprep.mubr.f32.mxu0 0.0
        %586 = vmatmul.mubr.f32.gmra.mrb[0].mxu0 %v300
        %v587 = vpop.f32.mrb[0].mxu0
        %v588 = vadd.f32 %v257, %v587
        %v589 = vpop.f32.mrb[0].mxu0
        %590 = vmatprep.mubr.f32.mxu0 0.0
        %591 = vmatmul.mubr.f32.gmra.mrb[0].mxu0 %v303
        %v592 = vpop.f32.mrb[0].mxu0
        %v593 = vadd.f32 %v257, %v592
        %v594 = vpop.f32.mrb[0].mxu0
        %595 = vmatprep.mubr.f32.mxu0 0.0
        %596 = vmatmul.mubr.f32.gmra.mrb[0].mxu0 %v306
        %v597 = vpop.f32.mrb[0].mxu0
        %v598 = vadd.f32 %v257, %v597
        %v599 = vpop.f32.mrb[0].mxu0
        %600 = vmatprep.mubr.f32.mxu0 0.0
        %601 = vmatmul.mubr.f32.gmra.mrb[0].mxu0 %v309
        %v602 = vpop.f32.mrb[0].mxu0
        %v603 = vadd.f32 %v257, %v602
        %v604 = vpop.f32.mrb[0].mxu0
        %605 = vmatprep.mubr.f32.mxu0 0.0
        %606 = vmatmul.mubr.f32.gmra.mrb[0].mxu0 %v312
        %v607 = vpop.f32.mrb[0].mxu0
        %v608 = vadd.f32 %v257, %v607
        %v609 = vpop.f32.mrb[0].mxu0
        %610 = vmatprep.mubr.f32.mxu0 0.0
        %611 = vmatmul.mubr.f32.gmra.mrb[0].mxu0 %v315
        %v612 = vpop.f32.mrb[0].mxu0
        %v613 = vadd.f32 %v257, %v612
        %v614 = vpop.f32.mrb[0].mxu0
        %615 = vmatprep.mubr.f32.mxu0 0.0
        %616 = vmatmul.mubr.f32.gmra.mrb[0].mxu0 %v318
        %v617 = vpop.f32.mrb[0].mxu0
        %v618 = vadd.f32 %v257, %v617
        %v619 = vpop.f32.mrb[0].mxu0
        %620 = vmatprep.mubr.f32.mxu0 0.0
        %621 = vmatmul.mubr.f32.gmra.mrb[0].mxu0 %v321
        %v622 = vpop.f32.mrb[0].mxu0
        %v623 = vadd.f32 %v257, %v622
        %v624 = vpop.f32.mrb[0].mxu0
        %625 = vmatprep.mubr.f32.mxu0 0.0
        %626 = vmatmul.mubr.f32.gmra.mrb[0].mxu0 %v324
        %v627 = vpop.f32.mrb[0].mxu0
        %v628 = vadd.f32 %v257, %v627
        %v629 = vpop.f32.mrb[0].mxu0
        %630 = vmatprep.mubr.f32.mxu0 0.0
        %631 = vmatmul.mubr.f32.gmra.mrb[0].mxu0 %v327
        %v632 = vpop.f32.mrb[0].mxu0
        %v633 = vadd.f32 %v257, %v632
        %v634 = vpop.f32.mrb[0].mxu0
        %635 = vmatprep.mubr.f32.mxu0 0.0
        %636 = vmatmul.mubr.f32.gmra.mrb[0].mxu0 %v330
        %v637 = vpop.f32.mrb[0].mxu0
        %v638 = vadd.f32 %v257, %v637
        %v639 = vpop.f32.mrb[0].mxu0
        %640 = vmatprep.mubr.f32.mxu0 0.0
        %641 = vmatmul.mubr.f32.gmra.mrb[0].mxu0 %v333
        %v642 = vpop.f32.mrb[0].mxu0
        %v643 = vadd.f32 %v257, %v642
        %v644 = vpop.f32.mrb[0].mxu0
        %645 = vmatprep.mubr.f32.mxu0 0.0
        %646 = vmatmul.mubr.f32.gmra.mrb[0].mxu0 %v336
        %v647 = vpop.f32.mrb[0].mxu0
        %v648 = vadd.f32 %v257, %v647
        %v649 = vpop.f32.mrb[0].mxu0
        %650 = vmatprep.mubr.f32.mxu0 0.0
        %651 = vmatmul.mubr.f32.gmra.mrb[0].mxu0 %v339
        %v652 = vpop.f32.mrb[0].mxu0
        %v653 = vadd.f32 %v257, %v652
        %v654 = vpop.f32.mrb[0].mxu0
        %655 = vmatprep.mubr.f32.mxu0 0.0
        %656 = vmatmul.mubr.f32.gmra.mrb[0].mxu0 %v342
        %v657 = vpop.f32.mrb[0].mxu0
        %v658 = vadd.f32 %v257, %v657
        %v659 = vpop.f32.mrb[0].mxu0
        %660 = vmatprep.mubr.f32.mxu0 0.0
        %661 = vmatmul.mubr.f32.gmra.mrb[0].mxu0 %v345
        %v662 = vpop.f32.mrb[0].mxu0
        %v663 = vadd.f32 %v257, %v662
        %v664 = vpop.f32.mrb[0].mxu0
        %665 = vmatprep.mubr.f32.mxu0 0.0
        %666 = vmatmul.mubr.f32.gmra.mrb[0].mxu0 %v348
        %v667 = vpop.f32.mrb[0].mxu0
        %v668 = vadd.f32 %v257, %v667
        %v669 = vpop.f32.mrb[0].mxu0
        %670 = vmatprep.mubr.f32.mxu0 0.0
        %671 = vmatmul.mubr.f32.gmra.mrb[0].mxu0 %v351
        %v672 = vpop.f32.mrb[0].mxu0
        %v673 = vadd.f32 %v257, %v672
        %v674 = vpop.f32.mrb[0].mxu0
        %675 = vmatprep.mubr.f32.mxu0 0.0
        %676 = vmatmul.mubr.f32.gmra.mrb[0].mxu0 %v354
        %v677 = vpop.f32.mrb[0].mxu0
        %v678 = vadd.f32 %v257, %v677
        %v679 = vpop.f32.mrb[0].mxu0
        %680 = vmatprep.mubr.f32.mxu0 0.0
        %681 = vmatmul.mubr.f32.gmra.mrb[0].mxu0 %v357
        %v682 = vpop.f32.mrb[0].mxu0
        %v683 = vadd.f32 %v257, %v682
        %v684 = vpop.f32.mrb[0].mxu0
        %685 = vmatprep.mubr.f32.mxu0 0.0
        %686 = vmatmul.mubr.f32.gmra.mrb[0].mxu0 %v360
        %v687 = vpop.f32.mrb[0].mxu0
        %v688 = vadd.f32 %v257, %v687
        %v689 = vpop.f32.mrb[0].mxu0
        %690 = vmatprep.mubr.f32.mxu0 0.0
        %691 = vmatmul.mubr.f32.gmra.mrb[0].mxu0 %v363
        %v692 = vpop.f32.mrb[0].mxu0
        %v693 = vadd.f32 %v257, %v692
        %v694 = vpop.f32.mrb[0].mxu0
        %695 = vmatprep.mubr.f32.mxu0 0.0
        %696 = vmatmul.mubr.f32.gmra.mrb[0].mxu0 %v366
        %v697 = vpop.f32.mrb[0].mxu0
        %v698 = vadd.f32 %v257, %v697
        %v699 = vpop.f32.mrb[0].mxu0
        %700 = vmatprep.mubr.f32.mxu0 0.0
        %701 = vmatmul.mubr.f32.gmra.mrb[0].mxu0 %v369
        %v702 = vpop.f32.mrb[0].mxu0
        %v703 = vadd.f32 %v257, %v702
        %v704 = vpop.f32.mrb[0].mxu0
        %705 = vmatprep.mubr.f32.mxu0 0.0
        %706 = vmatmul.mubr.f32.gmra.mrb[0].mxu0 %v372
        %v707 = vpop.f32.mrb[0].mxu0
        %v708 = vadd.f32 %v257, %v707
        %v709 = vpop.f32.mrb[0].mxu0
        %710 = vmatprep.mubr.f32.mxu0 0.0
        %711 = vmatmul.mubr.f32.gmra.mrb[0].mxu0 %v375
        %v712 = vpop.f32.mrb[0].mxu0
        %v713 = vadd.f32 %v257, %v712
        %v714 = vpop.f32.mrb[0].mxu0
        %715 = vmatprep.mubr.f32.mxu0 0.0
        %716 = vmatmul.mubr.f32.gmra.mrb[0].mxu0 %v378
        %v717 = vpop.f32.mrb[0].mxu0
        %v718 = vadd.f32 %v257, %v717
        %v719 = vpop.f32.mrb[0].mxu0
        %720 = vmatprep.mubr.f32.mxu0 0.0
        %721 = vmatmul.mubr.f32.gmra.mrb[0].mxu0 %v381
        %v722 = vpop.f32.mrb[0].mxu0
        %v723 = vadd.f32 %v257, %v722
        %v724 = vpop.f32.mrb[0].mxu0
        %725 = vmatprep.mubr.f32.mxu0 0.0
        %726 = vmatmul.mubr.f32.gmra.mrb[0].mxu0 %v384
        %v727 = vpop.f32.mrb[0].mxu0
        %v728 = vadd.f32 %v257, %v727
        %v729 = vpop.f32.mrb[0].mxu0
        %730 = vmatprep.mubr.f32.mxu0 0.0
        %731 = vmatmul.mubr.f32.gmra.mrb[0].mxu0 %v387
        %v732 = vpop.f32.mrb[0].mxu0
        %v733 = vadd.f32 %v257, %v732
        %v734 = vpop.f32.mrb[0].mxu0
        %735 = vmatprep.mubr.f32.mxu0 0.0
        %736 = vmatmul.mubr.f32.gmra.mrb[0].mxu0 %v390
        %v737 = vpop.f32.mrb[0].mxu0
        %v738 = vadd.f32 %v257, %v737
        %v739 = vpop.f32.mrb[0].mxu0
        %740 = vmatprep.mubr.f32.mxu0 0.0
        %741 = vmatmul.mubr.f32.gmra.mrb[0].mxu0 %v393
        %v742 = vpop.f32.mrb[0].mxu0
        %v743 = vadd.f32 %v257, %v742
        %v744 = vpop.f32.mrb[0].mxu0
        %745 = vmatprep.mubr.f32.mxu0 0.0
        %746 = vmatmul.mubr.f32.gmra.mrb[0].mxu0 %v396
        %v747 = vpop.f32.mrb[0].mxu0
        %v748 = vadd.f32 %v257, %v747
        %v749 = vpop.f32.mrb[0].mxu0
        %750 = vmatprep.mubr.f32.mxu0 0.0
        %751 = vmatmul.mubr.f32.gmra.mrb[0].mxu0 %v399
        %v752 = vpop.f32.mrb[0].mxu0
        %v753 = vadd.f32 %v257, %v752
        %v754 = vpop.f32.mrb[0].mxu0
        %755 = vmatprep.mubr.f32.mxu0 0.0
        %756 = vmatmul.mubr.f32.gmra.mrb[0].mxu0 %v402
        %v757 = vpop.f32.mrb[0].mxu0
        %v758 = vadd.f32 %v257, %v757
        %v759 = vpop.f32.mrb[0].mxu0
        %760 = vmatprep.mubr.f32.mxu0 0.0
        %761 = vmatmul.mubr.f32.gmra.mrb[0].mxu0 %v405
        %v762 = vpop.f32.mrb[0].mxu0
        %v763 = vadd.f32 %v257, %v762
        %v764 = vpop.f32.mrb[0].mxu0
        %765 = vmatprep.mubr.f32.mxu0 0.0
        %766 = vmatmul.mubr.f32.gmra.mrb[0].mxu0 %v408
        %v767 = vpop.f32.mrb[0].mxu0
        %v768 = vadd.f32 %v257, %v767
        %v769 = vpop.f32.mrb[0].mxu0
        %770 = vmatprep.mubr.f32.mxu0 0.0
        %771 = vmatmul.mubr.f32.gmra.mrb[0].mxu0 %v411
        %v772 = vpop.f32.mrb[0].mxu0
        %v773 = vadd.f32 %v257, %v772
        %v774 = vpop.f32.mrb[0].mxu0
        %775 = vmatprep.mubr.f32.mxu0 0.0
        %776 = vmatmul.mubr.f32.gmra.mrb[0].mxu0 %v414
        %v777 = vpop.f32.mrb[0].mxu0
        %v778 = vadd.f32 %v257, %v777
        %v779 = vpop.f32.mrb[0].mxu0
        %780 = vmatprep.mubr.f32.mxu0 0.0
        %781 = vmatmul.mubr.f32.gmra.mrb[0].mxu0 %v417
        %v782 = vpop.f32.mrb[0].mxu0
        %v783 = vadd.f32 %v257, %v782
        %v784 = vpop.f32.mrb[0].mxu0
        %785 = vmatprep.mubr.f32.mxu0 0.0
        %786 = vmatmul.mubr.f32.gmra.mrb[0].mxu0 %v420
        %v787 = vpop.f32.mrb[0].mxu0
        %v788 = vadd.f32 %v257, %v787
        %v789 = vpop.f32.mrb[0].mxu0
        %790 = vmatprep.mubr.f32.mxu0 0.0
        %791 = vmatmul.mubr.f32.gmra.mrb[0].mxu0 %v423
        %v792 = vpop.f32.mrb[0].mxu0
        %v793 = vadd.f32 %v257, %v792
        %v794 = vpop.f32.mrb[0].mxu0
        %795 = vmatprep.mubr.f32.mxu0 0.0
        %796 = vmatmul.mubr.f32.gmra.mrb[0].mxu0 %v426
        %v797 = vpop.f32.mrb[0].mxu0
        %v798 = vadd.f32 %v257, %v797
        %v799 = vpop.f32.mrb[0].mxu0
        %800 = vmatprep.mubr.f32.mxu0 0.0
        %801 = vmatmul.mubr.f32.gmra.mrb[0].mxu0 %v429
        %v802 = vpop.f32.mrb[0].mxu0
        %v803 = vadd.f32 %v257, %v802
        %v804 = vpop.f32.mrb[0].mxu0
        %805 = vmatprep.mubr.f32.mxu0 0.0
        %806 = vmatmul.mubr.f32.gmra.mrb[0].mxu0 %v432
        %v807 = vpop.f32.mrb[0].mxu0
        %v808 = vadd.f32 %v257, %v807
        %v809 = vpop.f32.mrb[0].mxu0
        %810 = vmatprep.mubr.f32.mxu0 0.0
        %811 = vmatmul.mubr.f32.gmra.mrb[0].mxu0 %v435
        %v812 = vpop.f32.mrb[0].mxu0
        %v813 = vadd.f32 %v257, %v812
        %v814 = vpop.f32.mrb[0].mxu0
        %815 = vmatprep.mubr.f32.mxu0 0.0
        %816 = vmatmul.mubr.f32.gmra.mrb[0].mxu0 %v438
        %v817 = vpop.f32.mrb[0].mxu0
        %v818 = vadd.f32 %v257, %v817
        %v819 = vpop.f32.mrb[0].mxu0
        %820 = vmatprep.mubr.f32.mxu0 0.0
        %821 = vmatmul.mubr.f32.gmra.mrb[0].mxu0 %v441
        %v822 = vpop.f32.mrb[0].mxu0
        %v823 = vadd.f32 %v257, %v822
        %v824 = vpop.f32.mrb[0].mxu0
        %825 = vmatprep.mubr.f32.mxu0 0.0
        %826 = vmatmul.mubr.f32.gmra.mrb[0].mxu0 %v444
        %v827 = vpop.f32.mrb[0].mxu0
        %v828 = vadd.f32 %v257, %v827
        %v829 = vpop.f32.mrb[0].mxu0
        %830 = vmatprep.mubr.f32.mxu0 0.0
        %831 = vmatmul.mubr.f32.gmra.mrb[0].mxu0 %v447
        %v832 = vpop.f32.mrb[0].mxu0
        %v833 = vadd.f32 %v257, %v832
        %v834 = vpop.f32.mrb[0].mxu0
        %835 = vmatprep.mubr.f32.mxu0 0.0
        %836 = vmatmul.mubr.f32.gmra.mrb[0].mxu0 %v450
        %v837 = vpop.f32.mrb[0].mxu0
        %v838 = vadd.f32 %v257, %v837
        %v839 = vpop.f32.mrb[0].mxu0
        %840 = vdwg.mxu0
        %vm841 = vcmask 64512
        %842 = vst.msk [vmem:[%s176] sm:$0xff] %vm841, %v523
        %843 = vst.msk [vmem:[%s176 + $0x8] sm:$0xff] %vm841, %v528
        %844 = vst.msk [vmem:[%s176 + $0x10] sm:$0xff] %vm841, %v533
        %845 = vst.msk [vmem:[%s176 + $0x18] sm:$0xff] %vm841, %v538
        %846 = vst.msk [vmem:[%s176 + $0x20] sm:$0xff] %vm841, %v543
        %847 = vst.msk [vmem:[%s176 + $0x28] sm:$0xff] %vm841, %v548
        %848 = vst.msk [vmem:[%s176 + $0x30] sm:$0xff] %vm841, %v553
        %849 = vst.msk [vmem:[%s176 + $0x38] sm:$0xff] %vm841, %v558
        %850 = vst.msk [vmem:[%s176 + $0x40] sm:$0xff] %vm841, %v563
        %851 = vst.msk [vmem:[%s176 + $0x48] sm:$0xff] %vm841, %v568
        %852 = vst.msk [vmem:[%s176 + $0x50] sm:$0xff] %vm841, %v573
        %853 = vst.msk [vmem:[%s176 + $0x58] sm:$0xff] %vm841, %v578
        %854 = vst.msk [vmem:[%s176 + $0x60] sm:$0xff] %vm841, %v583
        %855 = vst.msk [vmem:[%s176 + $0x68] sm:$0xff] %vm841, %v588
        %856 = vst.msk [vmem:[%s176 + $0x70] sm:$0xff] %vm841, %v593
        %857 = vst.msk [vmem:[%s176 + $0x78] sm:$0xff] %vm841, %v598
        %858 = vst.msk [vmem:[%s176 + $0x80] sm:$0xff] %vm841, %v603
        %859 = vst.msk [vmem:[%s176 + $0x88] sm:$0xff] %vm841, %v608
        %860 = vst.msk [vmem:[%s176 + $0x90] sm:$0xff] %vm841, %v613
        %861 = vst.msk [vmem:[%s176 + $0x98] sm:$0xff] %vm841, %v618
        %862 = vst.msk [vmem:[%s176 + $0xa0] sm:$0xff] %vm841, %v623
        %863 = vst.msk [vmem:[%s176 + $0xa8] sm:$0xff] %vm841, %v628
        %864 = vst.msk [vmem:[%s176 + $0xb0] sm:$0xff] %vm841, %v633
        %865 = vst.msk [vmem:[%s176 + $0xb8] sm:$0xff] %vm841, %v638
        %866 = vst.msk [vmem:[%s176 + $0xc0] sm:$0xff] %vm841, %v643
        %867 = vst.msk [vmem:[%s176 + $0xc8] sm:$0xff] %vm841, %v648
        %868 = vst.msk [vmem:[%s176 + $0xd0] sm:$0xff] %vm841, %v653
        %869 = vst.msk [vmem:[%s176 + $0xd8] sm:$0xff] %vm841, %v658
        %870 = vst.msk [vmem:[%s176 + $0xe0] sm:$0xff] %vm841, %v663
        %871 = vst.msk [vmem:[%s176 + $0xe8] sm:$0xff] %vm841, %v668
        %872 = vst.msk [vmem:[%s176 + $0xf0] sm:$0xff] %vm841, %v673
        %873 = vst.msk [vmem:[%s176 + $0xf8] sm:$0xff] %vm841, %v678
        %874 = vst.msk [vmem:[%s176 + $0x100] sm:$0xff] %vm841, %v683
        %875 = vst.msk [vmem:[%s176 + $0x108] sm:$0xff] %vm841, %v688
        %876 = vst.msk [vmem:[%s176 + $0x110] sm:$0xff] %vm841, %v693
        %877 = vst.msk [vmem:[%s176 + $0x118] sm:$0xff] %vm841, %v698
        %878 = vst.msk [vmem:[%s176 + $0x120] sm:$0xff] %vm841, %v703
        %879 = vst.msk [vmem:[%s176 + $0x128] sm:$0xff] %vm841, %v708
        %880 = vst.msk [vmem:[%s176 + $0x130] sm:$0xff] %vm841, %v713
        %881 = vst.msk [vmem:[%s176 + $0x138] sm:$0xff] %vm841, %v718
        %882 = vst.msk [vmem:[%s176 + $0x140] sm:$0xff] %vm841, %v723
        %883 = vst.msk [vmem:[%s176 + $0x148] sm:$0xff] %vm841, %v728
        %884 = vst.msk [vmem:[%s176 + $0x150] sm:$0xff] %vm841, %v733
        %885 = vst.msk [vmem:[%s176 + $0x158] sm:$0xff] %vm841, %v738
        %886 = vst.msk [vmem:[%s176 + $0x160] sm:$0xff] %vm841, %v743
        %887 = vst.msk [vmem:[%s176 + $0x168] sm:$0xff] %vm841, %v748
        %888 = vst.msk [vmem:[%s176 + $0x170] sm:$0xff] %vm841, %v753
        %889 = vst.msk [vmem:[%s176 + $0x178] sm:$0xff] %vm841, %v758
        %890 = vst.msk [vmem:[%s176 + $0x180] sm:$0xff] %vm841, %v763
        %891 = vst.msk [vmem:[%s176 + $0x188] sm:$0xff] %vm841, %v768
        %892 = vst.msk [vmem:[%s176 + $0x190] sm:$0xff] %vm841, %v773
        %893 = vst.msk [vmem:[%s176 + $0x198] sm:$0xff] %vm841, %v778
        %894 = vst.msk [vmem:[%s176 + $0x1a0] sm:$0xff] %vm841, %v783
        %895 = vst.msk [vmem:[%s176 + $0x1a8] sm:$0xff] %vm841, %v788
        %896 = vst.msk [vmem:[%s176 + $0x1b0] sm:$0xff] %vm841, %v793
        %897 = vst.msk [vmem:[%s176 + $0x1b8] sm:$0xff] %vm841, %v798
        %898 = vst.msk [vmem:[%s176 + $0x1c0] sm:$0xff] %vm841, %v803
        %899 = vst.msk [vmem:[%s176 + $0x1c8] sm:$0xff] %vm841, %v808
        %900 = vst.msk [vmem:[%s176 + $0x1d0] sm:$0xff] %vm841, %v813
        %901 = vst.msk [vmem:[%s176 + $0x1d8] sm:$0xff] %vm841, %v818
        %902 = vst.msk [vmem:[%s176 + $0x1e0] sm:$0xff] %vm841, %v823
        %903 = vst.msk [vmem:[%s176 + $0x1e8] sm:$0xff] %vm841, %v828
        %904 = vst.msk [vmem:[%s176 + $0x1f0] sm:$0xff] %vm841, %v833
        %905 = vst.msk [vmem:[%s176 + $0x1f8] sm:$0xff] %vm841, %v838
        %s906 = sand.u32 %s104, 1
        %s907 = sand.u32 %s104, 1
        %s908 = smul.addr %s907, 512
        %s909 = scalar_lea.vmem [#allocation2], %s908
        // Predicated region
        $region33: #{tpu_custom_call.1} parent=31 // pred_check
          %p910 = pneg %p114
        $region34: #{tpu_custom_call.1} parent=31 // pred_check_branch
          %912 = sbr.rel (%p910) target = $region36
        $region35: #{tpu_custom_call.1} parent=31 // pred_region
          %s913 = smul.u32 32, %s18
          %s914 = smul.addr %s19, 2
          %s915 = smul.addr %s913, 4
          %s916 = sadd.s32 %s914, %s915
          %s917 = smul.addr %s916, 8
          %s918 = scalar_lea.vmem %s3, %s917
          // Predicated region
          $region37: #{tpu_custom_call.1} parent=35 // pred_check
            _
          $region38: #{tpu_custom_call.1} parent=35 // pred_check_branch
            %920 = sbr.rel (0) target = $region40
          $region39: #{tpu_custom_call.1} parent=35 // pred_region
            // Predicated region
            $region41: #{tpu_custom_call.1} parent=39 // pred_check
              _
            $region42: #{tpu_custom_call.1} parent=39 // pred_check_branch
              %922 = sbr.rel (0) target = $region44
            $region43: #{tpu_custom_call.1} parent=39 // pred_region
              // Predicated region
              $region56: #{tpu_custom_call.1} parent=43 // pred_check
                _
              $region57: #{tpu_custom_call.1} parent=43 // pred_check_branch
                %1063 = sbr.rel (0) target = $region59
              $region58: #{tpu_custom_call.1} parent=43 // pred_region
                loop: start=0, step=1, limit=1
                $region60: #{tpu_custom_call.1} parent=58 // loop_pre_header
                  _
                $region61: #{tpu_custom_call.1} parent=58 // loop_header
                  %s1065 = sphi 0, %s1069
                  %p1066 = scmp.ge.s32.totalorder %s1065, 1
                  %s1070 = sphi %s909, %s909
                  %s1071 = sphi %s918, %s918
                $region62: #{tpu_custom_call.1} parent=58 // loop_header_branch
                  %1068 = sbr.rel (%p1066) target = $region66
                $region63: #{tpu_custom_call.1} parent=58 // loop_body
                  %v1072 = vld [vmem:[%s1070] sm:$0xff]
                  %1073 = vst [vmem:[%s1071] sm:$0xff] %v1072
                  %v1074 = vld [vmem:[%s1070 + $0x8] sm:$0xff]
                  %1075 = vst [vmem:[%s1071 + $0x8] sm:$0xff] %v1074
                  %v1076 = vld [vmem:[%s1070 + $0x10] sm:$0xff]
                  %1077 = vst [vmem:[%s1071 + $0x20] sm:$0xff] %v1076
                  %v1078 = vld [vmem:[%s1070 + $0x18] sm:$0xff]
                  %1079 = vst [vmem:[%s1071 + $0x28] sm:$0xff] %v1078
                  %v1080 = vld [vmem:[%s1070 + $0x20] sm:$0xff]
                  %1081 = vst [vmem:[%s1071 + $0x40] sm:$0xff] %v1080
                  %v1082 = vld [vmem:[%s1070 + $0x28] sm:$0xff]
                  %1083 = vst [vmem:[%s1071 + $0x48] sm:$0xff] %v1082
                  %v1084 = vld [vmem:[%s1070 + $0x30] sm:$0xff]
                  %1085 = vst [vmem:[%s1071 + $0x60] sm:$0xff] %v1084
                  %v1086 = vld [vmem:[%s1070 + $0x38] sm:$0xff]
                  %1087 = vst [vmem:[%s1071 + $0x68] sm:$0xff] %v1086
                  %v1088 = vld [vmem:[%s1070 + $0x40] sm:$0xff]
                  %1089 = vst [vmem:[%s1071 + $0x80] sm:$0xff] %v1088
                  %v1090 = vld [vmem:[%s1070 + $0x48] sm:$0xff]
                  %1091 = vst [vmem:[%s1071 + $0x88] sm:$0xff] %v1090
                  %v1092 = vld [vmem:[%s1070 + $0x50] sm:$0xff]
                  %1093 = vst [vmem:[%s1071 + $0xa0] sm:$0xff] %v1092
                  %v1094 = vld [vmem:[%s1070 + $0x58] sm:$0xff]
                  %1095 = vst [vmem:[%s1071 + $0xa8] sm:$0xff] %v1094
                  %v1096 = vld [vmem:[%s1070 + $0x60] sm:$0xff]
                  %1097 = vst [vmem:[%s1071 + $0xc0] sm:$0xff] %v1096
                  %v1098 = vld [vmem:[%s1070 + $0x68] sm:$0xff]
                  %1099 = vst [vmem:[%s1071 + $0xc8] sm:$0xff] %v1098
                  %v1100 = vld [vmem:[%s1070 + $0x70] sm:$0xff]
                  %1101 = vst [vmem:[%s1071 + $0xe0] sm:$0xff] %v1100
                  %v1102 = vld [vmem:[%s1070 + $0x78] sm:$0xff]
                  %1103 = vst [vmem:[%s1071 + $0xe8] sm:$0xff] %v1102
                  %v1104 = vld [vmem:[%s1070 + $0x80] sm:$0xff]
                  %1105 = vst [vmem:[%s1071 + $0x100] sm:$0xff] %v1104
                  %v1106 = vld [vmem:[%s1070 + $0x88] sm:$0xff]
                  %1107 = vst [vmem:[%s1071 + $0x108] sm:$0xff] %v1106
                  %v1108 = vld [vmem:[%s1070 + $0x90] sm:$0xff]
                  %1109 = vst [vmem:[%s1071 + $0x120] sm:$0xff] %v1108
                  %v1110 = vld [vmem:[%s1070 + $0x98] sm:$0xff]
                  %1111 = vst [vmem:[%s1071 + $0x128] sm:$0xff] %v1110
                  %v1112 = vld [vmem:[%s1070 + $0xa0] sm:$0xff]
                  %1113 = vst [vmem:[%s1071 + $0x140] sm:$0xff] %v1112
                  %v1114 = vld [vmem:[%s1070 + $0xa8] sm:$0xff]
                  %1115 = vst [vmem:[%s1071 + $0x148] sm:$0xff] %v1114
                  %v1116 = vld [vmem:[%s1070 + $0xb0] sm:$0xff]
                  %1117 = vst [vmem:[%s1071 + $0x160] sm:$0xff] %v1116
                  %v1118 = vld [vmem:[%s1070 + $0xb8] sm:$0xff]
                  %1119 = vst [vmem:[%s1071 + $0x168] sm:$0xff] %v1118
                  %v1120 = vld [vmem:[%s1070 + $0xc0] sm:$0xff]
                  %1121 = vst [vmem:[%s1071 + $0x180] sm:$0xff] %v1120
                  %v1122 = vld [vmem:[%s1070 + $0xc8] sm:$0xff]
                  %1123 = vst [vmem:[%s1071 + $0x188] sm:$0xff] %v1122
                  %v1124 = vld [vmem:[%s1070 + $0xd0] sm:$0xff]
                  %1125 = vst [vmem:[%s1071 + $0x1a0] sm:$0xff] %v1124
                  %v1126 = vld [vmem:[%s1070 + $0xd8] sm:$0xff]
                  %1127 = vst [vmem:[%s1071 + $0x1a8] sm:$0xff] %v1126
                  %v1128 = vld [vmem:[%s1070 + $0xe0] sm:$0xff]
                  %1129 = vst [vmem:[%s1071 + $0x1c0] sm:$0xff] %v1128
                  %v1130 = vld [vmem:[%s1070 + $0xe8] sm:$0xff]
                  %1131 = vst [vmem:[%s1071 + $0x1c8] sm:$0xff] %v1130
                  %v1132 = vld [vmem:[%s1070 + $0xf0] sm:$0xff]
                  %1133 = vst [vmem:[%s1071 + $0x1e0] sm:$0xff] %v1132
                  %v1134 = vld [vmem:[%s1070 + $0xf8] sm:$0xff]
                  %1135 = vst [vmem:[%s1071 + $0x1e8] sm:$0xff] %v1134
                  %v1136 = vld [vmem:[%s1070 + $0x100] sm:$0xff]
                  %1137 = vst [vmem:[%s1071 + $0x200] sm:$0xff] %v1136
                  %v1138 = vld [vmem:[%s1070 + $0x108] sm:$0xff]
                  %1139 = vst [vmem:[%s1071 + $0x208] sm:$0xff] %v1138
                  %v1140 = vld [vmem:[%s1070 + $0x110] sm:$0xff]
                  %1141 = vst [vmem:[%s1071 + $0x220] sm:$0xff] %v1140
                  %v1142 = vld [vmem:[%s1070 + $0x118] sm:$0xff]
                  %1143 = vst [vmem:[%s1071 + $0x228] sm:$0xff] %v1142
                  %v1144 = vld [vmem:[%s1070 + $0x120] sm:$0xff]
                  %1145 = vst [vmem:[%s1071 + $0x240] sm:$0xff] %v1144
                  %v1146 = vld [vmem:[%s1070 + $0x128] sm:$0xff]
                  %1147 = vst [vmem:[%s1071 + $0x248] sm:$0xff] %v1146
                  %v1148 = vld [vmem:[%s1070 + $0x130] sm:$0xff]
                  %1149 = vst [vmem:[%s1071 + $0x260] sm:$0xff] %v1148
                  %v1150 = vld [vmem:[%s1070 + $0x138] sm:$0xff]
                  %1151 = vst [vmem:[%s1071 + $0x268] sm:$0xff] %v1150
                  %v1152 = vld [vmem:[%s1070 + $0x140] sm:$0xff]
                  %1153 = vst [vmem:[%s1071 + $0x280] sm:$0xff] %v1152
                  %v1154 = vld [vmem:[%s1070 + $0x148] sm:$0xff]
                  %1155 = vst [vmem:[%s1071 + $0x288] sm:$0xff] %v1154
                  %v1156 = vld [vmem:[%s1070 + $0x150] sm:$0xff]
                  %1157 = vst [vmem:[%s1071 + $0x2a0] sm:$0xff] %v1156
                  %v1158 = vld [vmem:[%s1070 + $0x158] sm:$0xff]
                  %1159 = vst [vmem:[%s1071 + $0x2a8] sm:$0xff] %v1158
                  %v1160 = vld [vmem:[%s1070 + $0x160] sm:$0xff]
                  %1161 = vst [vmem:[%s1071 + $0x2c0] sm:$0xff] %v1160
                  %v1162 = vld [vmem:[%s1070 + $0x168] sm:$0xff]
                  %1163 = vst [vmem:[%s1071 + $0x2c8] sm:$0xff] %v1162
                  %v1164 = vld [vmem:[%s1070 + $0x170] sm:$0xff]
                  %1165 = vst [vmem:[%s1071 + $0x2e0] sm:$0xff] %v1164
                  %v1166 = vld [vmem:[%s1070 + $0x178] sm:$0xff]
                  %1167 = vst [vmem:[%s1071 + $0x2e8] sm:$0xff] %v1166
                  %v1168 = vld [vmem:[%s1070 + $0x180] sm:$0xff]
                  %1169 = vst [vmem:[%s1071 + $0x300] sm:$0xff] %v1168
                  %v1170 = vld [vmem:[%s1070 + $0x188] sm:$0xff]
                  %1171 = vst [vmem:[%s1071 + $0x308] sm:$0xff] %v1170
                  %v1172 = vld [vmem:[%s1070 + $0x190] sm:$0xff]
                  %1173 = vst [vmem:[%s1071 + $0x320] sm:$0xff] %v1172
                  %v1174 = vld [vmem:[%s1070 + $0x198] sm:$0xff]
                  %1175 = vst [vmem:[%s1071 + $0x328] sm:$0xff] %v1174
                  %v1176 = vld [vmem:[%s1070 + $0x1a0] sm:$0xff]
                  %1177 = vst [vmem:[%s1071 + $0x340] sm:$0xff] %v1176
                  %v1178 = vld [vmem:[%s1070 + $0x1a8] sm:$0xff]
                  %1179 = vst [vmem:[%s1071 + $0x348] sm:$0xff] %v1178
                  %v1180 = vld [vmem:[%s1070 + $0x1b0] sm:$0xff]
                  %1181 = vst [vmem:[%s1071 + $0x360] sm:$0xff] %v1180
                  %v1182 = vld [vmem:[%s1070 + $0x1b8] sm:$0xff]
                  %1183 = vst [vmem:[%s1071 + $0x368] sm:$0xff] %v1182
                  %v1184 = vld [vmem:[%s1070 + $0x1c0] sm:$0xff]
                  %1185 = vst [vmem:[%s1071 + $0x380] sm:$0xff] %v1184
                  %v1186 = vld [vmem:[%s1070 + $0x1c8] sm:$0xff]
                  %1187 = vst [vmem:[%s1071 + $0x388] sm:$0xff] %v1186
                  %v1188 = vld [vmem:[%s1070 + $0x1d0] sm:$0xff]
                  %1189 = vst [vmem:[%s1071 + $0x3a0] sm:$0xff] %v1188
                  %v1190 = vld [vmem:[%s1070 + $0x1d8] sm:$0xff]
                  %1191 = vst [vmem:[%s1071 + $0x3a8] sm:$0xff] %v1190
                  %v1192 = vld [vmem:[%s1070 + $0x1e0] sm:$0xff]
                  %1193 = vst [vmem:[%s1071 + $0x3c0] sm:$0xff] %v1192
                  %v1194 = vld [vmem:[%s1070 + $0x1e8] sm:$0xff]
                  %1195 = vst [vmem:[%s1071 + $0x3c8] sm:$0xff] %v1194
                  %v1196 = vld [vmem:[%s1070 + $0x1f0] sm:$0xff]
                  %1197 = vst [vmem:[%s1071 + $0x3e0] sm:$0xff] %v1196
                  %v1198 = vld [vmem:[%s1070 + $0x1f8] sm:$0xff]
                  %1199 = vst [vmem:[%s1071 + $0x3e8] sm:$0xff] %v1198
                $region64: #{tpu_custom_call.1} parent=58 // loop_footer
                  %s1069 = sadd.s32 1, %s1065
                $region65: #{tpu_custom_call.1} parent=58 // loop_footer_branch
                  %1064 = sbr.rel target = $region61
                $region66: #{tpu_custom_call.1} parent=58 // loop_exit
                  _
              $region59: #{tpu_custom_call.1} parent=43 // pred_fallthru
                _
              // Predicated region
              $region67: #{tpu_custom_call.1} parent=43 // pred_check
                _
              $region68: #{tpu_custom_call.1} parent=43 // pred_check_branch
                %1201 = sbr.rel target = $region70
              $region69: #{tpu_custom_call.1} parent=43 // pred_region
                _
              $region70: #{tpu_custom_call.1} parent=43 // pred_fallthru
                _
            $region44: #{tpu_custom_call.1} parent=39 // pred_fallthru
              _
            // Predicated region
            $region45: #{tpu_custom_call.1} parent=39 // pred_check
              _
            $region46: #{tpu_custom_call.1} parent=39 // pred_check_branch
              %924 = sbr.rel target = $region48
            $region47: #{tpu_custom_call.1} parent=39 // pred_region
              loop: start=0, step=1, limit=1
              $region49: #{tpu_custom_call.1} parent=47 // loop_pre_header
                _
              $region50: #{tpu_custom_call.1} parent=47 // loop_header
                %s927 = sphi 0, %s931
                %p928 = scmp.ge.s32.totalorder %s927, 1
                %s932 = sphi %s909, %s909
                %s933 = sphi %s918, %s918
              $region51: #{tpu_custom_call.1} parent=47 // loop_header_branch
                %930 = sbr.rel (%p928) target = $region55
              $region52: #{tpu_custom_call.1} parent=47 // loop_body
                %v934 = vld [vmem:[%s932] sm:$0xff]
                %935 = vst [vmem:[%s933] sm:$0xff] %v934
                %v936 = vld [vmem:[%s932 + $0x8] sm:$0xff]
                %937 = vst [vmem:[%s933 + $0x8] sm:$0xff] %v936
                %v938 = vld [vmem:[%s932 + $0x10] sm:$0xff]
                %939 = vst [vmem:[%s933 + $0x20] sm:$0xff] %v938
                %v940 = vld [vmem:[%s932 + $0x18] sm:$0xff]
                %941 = vst [vmem:[%s933 + $0x28] sm:$0xff] %v940
                %v942 = vld [vmem:[%s932 + $0x20] sm:$0xff]
                %943 = vst [vmem:[%s933 + $0x40] sm:$0xff] %v942
                %v944 = vld [vmem:[%s932 + $0x28] sm:$0xff]
                %945 = vst [vmem:[%s933 + $0x48] sm:$0xff] %v944
                %v946 = vld [vmem:[%s932 + $0x30] sm:$0xff]
                %947 = vst [vmem:[%s933 + $0x60] sm:$0xff] %v946
                %v948 = vld [vmem:[%s932 + $0x38] sm:$0xff]
                %949 = vst [vmem:[%s933 + $0x68] sm:$0xff] %v948
                %v950 = vld [vmem:[%s932 + $0x40] sm:$0xff]
                %951 = vst [vmem:[%s933 + $0x80] sm:$0xff] %v950
                %v952 = vld [vmem:[%s932 + $0x48] sm:$0xff]
                %953 = vst [vmem:[%s933 + $0x88] sm:$0xff] %v952
                %v954 = vld [vmem:[%s932 + $0x50] sm:$0xff]
                %955 = vst [vmem:[%s933 + $0xa0] sm:$0xff] %v954
                %v956 = vld [vmem:[%s932 + $0x58] sm:$0xff]
                %957 = vst [vmem:[%s933 + $0xa8] sm:$0xff] %v956
                %v958 = vld [vmem:[%s932 + $0x60] sm:$0xff]
                %959 = vst [vmem:[%s933 + $0xc0] sm:$0xff] %v958
                %v960 = vld [vmem:[%s932 + $0x68] sm:$0xff]
                %961 = vst [vmem:[%s933 + $0xc8] sm:$0xff] %v960
                %v962 = vld [vmem:[%s932 + $0x70] sm:$0xff]
                %963 = vst [vmem:[%s933 + $0xe0] sm:$0xff] %v962
                %v964 = vld [vmem:[%s932 + $0x78] sm:$0xff]
                %965 = vst [vmem:[%s933 + $0xe8] sm:$0xff] %v964
                %v966 = vld [vmem:[%s932 + $0x80] sm:$0xff]
                %967 = vst [vmem:[%s933 + $0x100] sm:$0xff] %v966
                %v968 = vld [vmem:[%s932 + $0x88] sm:$0xff]
                %969 = vst [vmem:[%s933 + $0x108] sm:$0xff] %v968
                %v970 = vld [vmem:[%s932 + $0x90] sm:$0xff]
                %971 = vst [vmem:[%s933 + $0x120] sm:$0xff] %v970
                %v972 = vld [vmem:[%s932 + $0x98] sm:$0xff]
                %973 = vst [vmem:[%s933 + $0x128] sm:$0xff] %v972
                %v974 = vld [vmem:[%s932 + $0xa0] sm:$0xff]
                %975 = vst [vmem:[%s933 + $0x140] sm:$0xff] %v974
                %v976 = vld [vmem:[%s932 + $0xa8] sm:$0xff]
                %977 = vst [vmem:[%s933 + $0x148] sm:$0xff] %v976
                %v978 = vld [vmem:[%s932 + $0xb0] sm:$0xff]
                %979 = vst [vmem:[%s933 + $0x160] sm:$0xff] %v978
                %v980 = vld [vmem:[%s932 + $0xb8] sm:$0xff]
                %981 = vst [vmem:[%s933 + $0x168] sm:$0xff] %v980
                %v982 = vld [vmem:[%s932 + $0xc0] sm:$0xff]
                %983 = vst [vmem:[%s933 + $0x180] sm:$0xff] %v982
                %v984 = vld [vmem:[%s932 + $0xc8] sm:$0xff]
                %985 = vst [vmem:[%s933 + $0x188] sm:$0xff] %v984
                %v986 = vld [vmem:[%s932 + $0xd0] sm:$0xff]
                %987 = vst [vmem:[%s933 + $0x1a0] sm:$0xff] %v986
                %v988 = vld [vmem:[%s932 + $0xd8] sm:$0xff]
                %989 = vst [vmem:[%s933 + $0x1a8] sm:$0xff] %v988
                %v990 = vld [vmem:[%s932 + $0xe0] sm:$0xff]
                %991 = vst [vmem:[%s933 + $0x1c0] sm:$0xff] %v990
                %v992 = vld [vmem:[%s932 + $0xe8] sm:$0xff]
                %993 = vst [vmem:[%s933 + $0x1c8] sm:$0xff] %v992
                %v994 = vld [vmem:[%s932 + $0xf0] sm:$0xff]
                %995 = vst [vmem:[%s933 + $0x1e0] sm:$0xff] %v994
                %v996 = vld [vmem:[%s932 + $0xf8] sm:$0xff]
                %997 = vst [vmem:[%s933 + $0x1e8] sm:$0xff] %v996
                %v998 = vld [vmem:[%s932 + $0x100] sm:$0xff]
                %999 = vst [vmem:[%s933 + $0x200] sm:$0xff] %v998
                %v1000 = vld [vmem:[%s932 + $0x108] sm:$0xff]
                %1001 = vst [vmem:[%s933 + $0x208] sm:$0xff] %v1000
                %v1002 = vld [vmem:[%s932 + $0x110] sm:$0xff]
                %1003 = vst [vmem:[%s933 + $0x220] sm:$0xff] %v1002
                %v1004 = vld [vmem:[%s932 + $0x118] sm:$0xff]
                %1005 = vst [vmem:[%s933 + $0x228] sm:$0xff] %v1004
                %v1006 = vld [vmem:[%s932 + $0x120] sm:$0xff]
                %1007 = vst [vmem:[%s933 + $0x240] sm:$0xff] %v1006
                %v1008 = vld [vmem:[%s932 + $0x128] sm:$0xff]
                %1009 = vst [vmem:[%s933 + $0x248] sm:$0xff] %v1008
                %v1010 = vld [vmem:[%s932 + $0x130] sm:$0xff]
                %1011 = vst [vmem:[%s933 + $0x260] sm:$0xff] %v1010
                %v1012 = vld [vmem:[%s932 + $0x138] sm:$0xff]
                %1013 = vst [vmem:[%s933 + $0x268] sm:$0xff] %v1012
                %v1014 = vld [vmem:[%s932 + $0x140] sm:$0xff]
                %1015 = vst [vmem:[%s933 + $0x280] sm:$0xff] %v1014
                %v1016 = vld [vmem:[%s932 + $0x148] sm:$0xff]
                %1017 = vst [vmem:[%s933 + $0x288] sm:$0xff] %v1016
                %v1018 = vld [vmem:[%s932 + $0x150] sm:$0xff]
                %1019 = vst [vmem:[%s933 + $0x2a0] sm:$0xff] %v1018
                %v1020 = vld [vmem:[%s932 + $0x158] sm:$0xff]
                %1021 = vst [vmem:[%s933 + $0x2a8] sm:$0xff] %v1020
                %v1022 = vld [vmem:[%s932 + $0x160] sm:$0xff]
                %1023 = vst [vmem:[%s933 + $0x2c0] sm:$0xff] %v1022
                %v1024 = vld [vmem:[%s932 + $0x168] sm:$0xff]
                %1025 = vst [vmem:[%s933 + $0x2c8] sm:$0xff] %v1024
                %v1026 = vld [vmem:[%s932 + $0x170] sm:$0xff]
                %1027 = vst [vmem:[%s933 + $0x2e0] sm:$0xff] %v1026
                %v1028 = vld [vmem:[%s932 + $0x178] sm:$0xff]
                %1029 = vst [vmem:[%s933 + $0x2e8] sm:$0xff] %v1028
                %v1030 = vld [vmem:[%s932 + $0x180] sm:$0xff]
                %1031 = vst [vmem:[%s933 + $0x300] sm:$0xff] %v1030
                %v1032 = vld [vmem:[%s932 + $0x188] sm:$0xff]
                %1033 = vst [vmem:[%s933 + $0x308] sm:$0xff] %v1032
                %v1034 = vld [vmem:[%s932 + $0x190] sm:$0xff]
                %1035 = vst [vmem:[%s933 + $0x320] sm:$0xff] %v1034
                %v1036 = vld [vmem:[%s932 + $0x198] sm:$0xff]
                %1037 = vst [vmem:[%s933 + $0x328] sm:$0xff] %v1036
                %v1038 = vld [vmem:[%s932 + $0x1a0] sm:$0xff]
                %1039 = vst [vmem:[%s933 + $0x340] sm:$0xff] %v1038
                %v1040 = vld [vmem:[%s932 + $0x1a8] sm:$0xff]
                %1041 = vst [vmem:[%s933 + $0x348] sm:$0xff] %v1040
                %v1042 = vld [vmem:[%s932 + $0x1b0] sm:$0xff]
                %1043 = vst [vmem:[%s933 + $0x360] sm:$0xff] %v1042
                %v1044 = vld [vmem:[%s932 + $0x1b8] sm:$0xff]
                %1045 = vst [vmem:[%s933 + $0x368] sm:$0xff] %v1044
                %v1046 = vld [vmem:[%s932 + $0x1c0] sm:$0xff]
                %1047 = vst [vmem:[%s933 + $0x380] sm:$0xff] %v1046
                %v1048 = vld [vmem:[%s932 + $0x1c8] sm:$0xff]
                %1049 = vst [vmem:[%s933 + $0x388] sm:$0xff] %v1048
                %v1050 = vld [vmem:[%s932 + $0x1d0] sm:$0xff]
                %1051 = vst [vmem:[%s933 + $0x3a0] sm:$0xff] %v1050
                %v1052 = vld [vmem:[%s932 + $0x1d8] sm:$0xff]
                %1053 = vst [vmem:[%s933 + $0x3a8] sm:$0xff] %v1052
                %v1054 = vld [vmem:[%s932 + $0x1e0] sm:$0xff]
                %1055 = vst [vmem:[%s933 + $0x3c0] sm:$0xff] %v1054
                %v1056 = vld [vmem:[%s932 + $0x1e8] sm:$0xff]
                %1057 = vst [vmem:[%s933 + $0x3c8] sm:$0xff] %v1056
                %v1058 = vld [vmem:[%s932 + $0x1f0] sm:$0xff]
                %1059 = vst [vmem:[%s933 + $0x3e0] sm:$0xff] %v1058
                %v1060 = vld [vmem:[%s932 + $0x1f8] sm:$0xff]
                %1061 = vst [vmem:[%s933 + $0x3e8] sm:$0xff] %v1060
              $region53: #{tpu_custom_call.1} parent=47 // loop_footer
                %s931 = sadd.s32 1, %s927
              $region54: #{tpu_custom_call.1} parent=47 // loop_footer_branch
                %926 = sbr.rel target = $region50
              $region55: #{tpu_custom_call.1} parent=47 // loop_exit
                _
            $region48: #{tpu_custom_call.1} parent=39 // pred_fallthru
              _
          $region40: #{tpu_custom_call.1} parent=35 // pred_fallthru
            _
          %1202 = vnop
        $region36: #{tpu_custom_call.1} parent=31 // pred_fallthru
          _
      $region32: #{tpu_custom_call.1} parent=5 // pred_fallthru
        _
      %p1203 = scmp.le.s32.totalorder 2, %s9
      // Predicated region
      $region71: #{tpu_custom_call.1} parent=5 // pred_check
        %p1204 = pneg %p1203
      $region72: #{tpu_custom_call.1} parent=5 // pred_check_branch
        %1206 = sbr.rel (%p1204) target = $region74
      $region73: #{tpu_custom_call.1} parent=5 // pred_region
        %s1207 = ssub.s32 %s9, 2
        // Predicated region
        $region75: #{tpu_custom_call.1} parent=73 // pred_check
          %p1208 = pneg %p120
        $region76: #{tpu_custom_call.1} parent=73 // pred_check_branch
          %1210 = sbr.rel (%p1208) target = $region78
        $region77: #{tpu_custom_call.1} parent=73 // pred_region
          %s1211 = sand.u32 %s105, 1
          %s1212 = sand.u32 %s105, 1
          %s1213 = smul.addr %s1212, 512
          %s1214 = scalar_lea.vmem [#allocation2], %s1213
        $region78: #{tpu_custom_call.1} parent=73 // pred_fallthru
          _
      $region74: #{tpu_custom_call.1} parent=5 // pred_fallthru
        _
    $region6: #{tpu_custom_call.1} parent=1 // loop_footer
      %s13 = sadd.s32 1, %s9
    $region7: #{tpu_custom_call.1} parent=1 // loop_footer_branch
      %8 = sbr.rel target = $region3
    $region8: #{tpu_custom_call.1} parent=1 // loop_exit
      _

</llo_original>
